<compile_context>
chip_gen: v7x
topology: tpu7x:2x2x1
jax: 0.10.0
libtpu: 0.0.40
codegen_flags: <defaults>
</compile_context>

<pallas_src>
import functools

import jax
import jax.numpy as jnp
import numpy as np
from jax import lax
from jax.experimental import pallas as pl
from jax.experimental.pallas import tpu as pltpu

# ---- "Config" (small synthetic sizes) ---------------------------------------
EMBEDDING_SIZE = 32          # Config.EMBEDDING_SIZE
CNN_KERNEL_NUM = 8           # Config.CNN_KERNEL_NUM
CNN_DROPOUT = 0.5            # Config.CNN_DROPOUT (inference -> identity)
KERNEL_SIZES = (3, 4, 5)
N_BRANCH = len(KERNEL_SIZES)
VOCAB = 32
BATCH = 2
SEQ_LEN = 16
C_PAD = 128                  # lane-dense channel padding (3*C = 24 -> 128)
K_TAPS = 8                   # taps padded 5 -> 8 so contraction = K_TAPS*VOCAB = 256
AUX_TAIL = 8                 # 8-aligned tail rows in the packed aux array


def textcnn_kernel(ids_ref, wfused_ref, aux_ref, out_ref, *,
                   batch, seq_len, vocab, k_taps, c_pad):
    """Shifted-one-hot patch -> single fused MXU matmul -> ReLU/mask/max -> fc."""
    bs = batch * seq_len

    # 1) Shifted one-hot patch: row r, lanes [k*V, (k+1)*V) = onehot(ids[r+k]).
    #    The shift is a rotation of the tiny (B*S, 1) int ids; wrap-around and
    #    cross-batch rows only ever feed zero-weight taps or time rows that the
    #    post-ReLU mask zeroes, so no zero padding is needed.
    ids = ids_ref[...]                                               # (B*S, 1) i32
    iota_v = lax.broadcasted_iota(jnp.int32, (bs, vocab), 1)
    pieces = []
    for k in range(k_taps):
        ids_k = ids if k == 0 else jnp.concatenate([ids[k:], ids[:k]], axis=0)
        pieces.append((ids_k == iota_v).astype(jnp.float32))         # (B*S, V)
    patch = jnp.concatenate(pieces, axis=1)                          # (B*S, K_TAPS*V)

    # 2) Whole front-end (embedding + all conv branches + all taps) in ONE
    #    lane-dense, 256-aligned MXU matmul against the folded weights.
    h = jnp.dot(patch, wfused_ref[...],
                preferred_element_type=jnp.float32)                  # (B*S, c_pad)

    # 3) Packed constants: rows [0, bs) = time-validity mask, then an 8-aligned
    #    (8, c_pad) tail holding conv bias / fc weight / fc bias.
    mask = aux_ref[0:bs, :]                                          # (B*S, c_pad)
    tail = aux_ref[bs:bs + AUX_TAIL, :]                              # (8, c_pad)
    bconv = tail[0:1, :]
    wfc = tail[1:2, :]
    bfc = tail[2:3, 0:1]

    # Bias + ReLU once on the full tensor, then zero invalid tail time rows
    # (safe post-ReLU: ReLU output >= 0, so 0 is neutral for the time max).
    h = jnp.maximum(h + bconv, 0.0) * mask

    # 4) Max over time per batch; fc as VPU multiply + lane reduce; sigmoid.
    pooled = jnp.max(h.reshape(batch, seq_len, c_pad), axis=1)       # (B, c_pad)
    # TODO(synk): training-mode dropout masking not implemented (inference only).
    logits = jnp.sum(pooled * wfc, axis=-1, keepdims=True) + bfc     # (B, 1)
    sig = jax.nn.sigmoid(logits)

    # 5) Lane-dense store: broadcast across all 128 lanes (unmasked vst);
    #    the wrapper slices lane 0.
    out_ref[...] = jnp.broadcast_to(sig, (batch, c_pad))


def prepare_params(params):
    """One-time weight re-layout: fold embedding into conv weights; pack constants."""
    C, E, V = CNN_KERNEL_NUM, EMBEDDING_SIZE, VOCAB
    emb = params["embedding"].astype(jnp.float32)                    # (V, E)

    # Fused weights: rows [k*V, (k+1)*V), cols [j*C, (j+1)*C) = emb @ W_Kj(tap k);
    # zero where tap k >= Kj, for the padded taps (5..7) and padded channels.
    tap_blocks = []
    for k in range(K_TAPS):
        branch_blocks = []
        for K in KERNEL_SIZES:
            if k < K:
                w = params[f"conv{K}_w"].astype(jnp.float32)         # (C, 1, K, E)
                branch_blocks.append(emb @ w[:, 0, k, :].T)          # (V, C)
            else:
                branch_blocks.append(jnp.zeros((V, C), jnp.float32))
        blk = jnp.concatenate(branch_blocks, axis=1)                 # (V, 3C)
        tap_blocks.append(jnp.pad(blk, ((0, 0), (0, C_PAD - N_BRANCH * C))))
    w_fused = jnp.concatenate(tap_blocks, axis=0)                    # (K_TAPS*V, 128)

    # Time-validity mask (static: depends only on S and the kernel sizes).
    mask = np.zeros((BATCH * SEQ_LEN, C_PAD), np.float32)
    for j, K in enumerate(KERNEL_SIZES):
        for r in range(BATCH * SEQ_LEN):
            if r % SEQ_LEN <= SEQ_LEN - K:
                mask[r, j * C:(j + 1) * C] = 1.0

    # Packed aux: [mask (B*S rows) | bconv | wfc | bfc | zero padding] = (40, 128).
    bconv = jnp.concatenate(
        [params[f"conv{K}_b"].astype(jnp.float32) for K in KERNEL_SIZES])
    bconv = jnp.pad(bconv, (0, C_PAD - N_BRANCH * C)).reshape(1, C_PAD)
    wfc = jnp.pad(params["fc_w"].astype(jnp.float32),
                  ((0, 0), (0, C_PAD - N_BRANCH * C)))               # (1, 128)
    bfc_row = jnp.full((1, C_PAD), params["fc_b"].astype(jnp.float32)[0])
    tail = jnp.concatenate(
        [bconv, wfc, bfc_row, jnp.zeros((AUX_TAIL - 3, C_PAD), jnp.float32)],
        axis=0)                                                      # (8, 128)
    aux = jnp.concatenate([jnp.asarray(mask), tail], axis=0)         # (B*S+8, 128)

    return dict(w_fused=w_fused, aux=aux)


def textcnn_forward(ids, prepared):
    """Whole model (a few KiB of operands) as one VMEM-resident pallas_call."""
    ids2 = ids.reshape(BATCH * SEQ_LEN, 1).astype(jnp.int32)
    kern = functools.partial(
        textcnn_kernel, batch=BATCH, seq_len=SEQ_LEN, vocab=VOCAB,
        k_taps=K_TAPS, c_pad=C_PAD)
    vmem = pl.BlockSpec(memory_space=pltpu.MemorySpace.VMEM)
    # TODO(synk): at real sizes, add a grid over B*S row tiles (multiple of 8,
    # "parallel" dimension_semantics so v7x's two TensorCores shard it, tile
    # re-derived for the 64 MiB / 32 MiB-scoped v7x VMEM), keep w_fused
    # resident via a constant index_map, cast the matmul operands to bf16, and
    # replace the one-hot fold with a scalar-prefetch HBM row gather once the
    # vocabulary is large.
    out = pl.pallas_call(
        kern,
        out_shape=jax.ShapeDtypeStruct((BATCH, C_PAD), jnp.float32),
        in_specs=[vmem, vmem, vmem],
        out_specs=vmem,
    )(ids2, prepared["w_fused"], prepared["aux"])
    return out[:, :1]


def textcnn_reference(ids, params):
    """Pure-JAX reference for validation (mirrors the PyTorch module)."""
    x = jnp.take(params["embedding"], ids, axis=0).astype(jnp.float32)  # (B,S,E)
    feats = []
    for K in KERNEL_SIZES:
        w = params[f"conv{K}_w"].astype(jnp.float32)                 # (C,1,K,E)
        b = params[f"conv{K}_b"].astype(jnp.float32)                 # (C,)
        T = SEQ_LEN - K + 1
        outs = []
        for t in range(T):
            patch = x[:, t:t + K, :]                                 # (B,K,E)
            outs.append(jnp.einsum("bke,cke->bc", patch, w[:, 0]) + b)
        conv = jnp.maximum(jnp.stack(outs, axis=2), 0.0)             # (B,C,T)
        feats.append(jnp.max(conv, axis=2))                          # (B,C)
    cat = jnp.concatenate(feats, axis=1)                             # (B,3C)
    logits = (cat @ params["fc_w"].astype(jnp.float32).T
              + params["fc_b"].astype(jnp.float32))
    return jax.nn.sigmoid(logits)


def init_params(key):
    ks = jax.random.split(key, 3 + 2 * len(KERNEL_SIZES))
    params = {}
    params["embedding"] = jax.random.normal(ks[0], (VOCAB, EMBEDDING_SIZE),
                                            jnp.float32) * 0.1
    for i, K in enumerate(KERNEL_SIZES):
        params[f"conv{K}_w"] = jax.random.normal(
            ks[1 + 2 * i], (CNN_KERNEL_NUM, 1, K, EMBEDDING_SIZE), jnp.float32) * 0.1
        params[f"conv{K}_b"] = jax.random.normal(
            ks[2 + 2 * i], (CNN_KERNEL_NUM,), jnp.float32) * 0.1
    params["fc_w"] = jax.random.normal(
        ks[-2], (1, len(KERNEL_SIZES) * CNN_KERNEL_NUM), jnp.float32) * 0.1
    params["fc_b"] = jax.random.normal(ks[-1], (1,), jnp.float32) * 0.1
    return params


if __name__ == "__main__":
    key = jax.random.PRNGKey(0)
    pkey, ikey = jax.random.split(key)
    params = init_params(pkey)
    ids = jax.random.randint(ikey, (BATCH, SEQ_LEN), 0, VOCAB, dtype=jnp.int32)

    prepared = prepare_params(params)            # one-time weight re-layout / fold
    out = jax.block_until_ready(textcnn_forward(ids, prepared))

    ref = jax.block_until_ready(textcnn_reference(ids, params))
    assert out.shape == (BATCH, 1), out.shape
    np.testing.assert_allclose(np.asarray(out), np.asarray(ref), rtol=1e-5, atol=1e-5)

    print("KERNEL_OK")
</pallas_src>

<mosaic_0001>
module attributes {stable_mosaic.version = 11 : i64} {
  func.func @textcnn_kernel(%arg0: memref<32x1xi32, #tpu.memory_space<vmem>>, %arg1: memref<256x128xf32, #tpu.memory_space<vmem>>, %arg2: memref<40x128xf32, #tpu.memory_space<vmem>>, %arg3: memref<2x128xf32, #tpu.memory_space<vmem>>) attributes {dimension_semantics = [], scalar_prefetch = 0 : i64, scratch_operands = 0 : i64, tpu.core_type = #tpu.core_type<tc>} {
    %c0 = arith.constant 0 : index
    %c0_0 = arith.constant 0 : index
    %0 = vector.load %arg0[%c0, %c0_0] : memref<32x1xi32, #tpu.memory_space<vmem>>, vector<32x1xi32>
    %1 = tpu.iota {dimensions = array<i32: 1>} : vector<32x32xi32>
    %2 = vector.broadcast %0 : vector<32x1xi32> to vector<32x32xi32>
    %3 = arith.cmpi eq, %2, %1 : vector<32x32xi32>
    %4 = arith.extui %3 : vector<32x32xi1> to vector<32x32xi32>
    %5 = arith.sitofp %4 : vector<32x32xi32> to vector<32x32xf32>
    %6 = vector.extract_strided_slice %0 {offsets = [1, 0], sizes = [31, 1], strides = [1, 1]} : vector<32x1xi32> to vector<31x1xi32>
    %7 = vector.extract_strided_slice %0 {offsets = [0, 0], sizes = [1, 1], strides = [1, 1]} : vector<32x1xi32> to vector<1x1xi32>
    %8 = tpu.concatenate %6, %7 in 0 : vector<31x1xi32>, vector<1x1xi32> -> vector<32x1xi32>
    %9 = vector.broadcast %8 : vector<32x1xi32> to vector<32x32xi32>
    %10 = arith.cmpi eq, %9, %1 : vector<32x32xi32>
    %11 = arith.extui %10 : vector<32x32xi1> to vector<32x32xi32>
    %12 = arith.sitofp %11 : vector<32x32xi32> to vector<32x32xf32>
    %13 = vector.extract_strided_slice %0 {offsets = [2, 0], sizes = [30, 1], strides = [1, 1]} : vector<32x1xi32> to vector<30x1xi32>
    %14 = vector.extract_strided_slice %0 {offsets = [0, 0], sizes = [2, 1], strides = [1, 1]} : vector<32x1xi32> to vector<2x1xi32>
    %15 = tpu.concatenate %13, %14 in 0 : vector<30x1xi32>, vector<2x1xi32> -> vector<32x1xi32>
    %16 = vector.broadcast %15 : vector<32x1xi32> to vector<32x32xi32>
    %17 = arith.cmpi eq, %16, %1 : vector<32x32xi32>
    %18 = arith.extui %17 : vector<32x32xi1> to vector<32x32xi32>
    %19 = arith.sitofp %18 : vector<32x32xi32> to vector<32x32xf32>
    %20 = vector.extract_strided_slice %0 {offsets = [3, 0], sizes = [29, 1], strides = [1, 1]} : vector<32x1xi32> to vector<29x1xi32>
    %21 = vector.extract_strided_slice %0 {offsets = [0, 0], sizes = [3, 1], strides = [1, 1]} : vector<32x1xi32> to vector<3x1xi32>
    %22 = tpu.concatenate %20, %21 in 0 : vector<29x1xi32>, vector<3x1xi32> -> vector<32x1xi32>
    %23 = vector.broadcast %22 : vector<32x1xi32> to vector<32x32xi32>
    %24 = arith.cmpi eq, %23, %1 : vector<32x32xi32>
    %25 = arith.extui %24 : vector<32x32xi1> to vector<32x32xi32>
    %26 = arith.sitofp %25 : vector<32x32xi32> to vector<32x32xf32>
    %27 = vector.extract_strided_slice %0 {offsets = [4, 0], sizes = [28, 1], strides = [1, 1]} : vector<32x1xi32> to vector<28x1xi32>
    %28 = vector.extract_strided_slice %0 {offsets = [0, 0], sizes = [4, 1], strides = [1, 1]} : vector<32x1xi32> to vector<4x1xi32>
    %29 = tpu.concatenate %27, %28 in 0 : vector<28x1xi32>, vector<4x1xi32> -> vector<32x1xi32>
    %30 = vector.broadcast %29 : vector<32x1xi32> to vector<32x32xi32>
    %31 = arith.cmpi eq, %30, %1 : vector<32x32xi32>
    %32 = arith.extui %31 : vector<32x32xi1> to vector<32x32xi32>
    %33 = arith.sitofp %32 : vector<32x32xi32> to vector<32x32xf32>
    %34 = vector.extract_strided_slice %0 {offsets = [5, 0], sizes = [27, 1], strides = [1, 1]} : vector<32x1xi32> to vector<27x1xi32>
    %35 = vector.extract_strided_slice %0 {offsets = [0, 0], sizes = [5, 1], strides = [1, 1]} : vector<32x1xi32> to vector<5x1xi32>
    %36 = tpu.concatenate %34, %35 in 0 : vector<27x1xi32>, vector<5x1xi32> -> vector<32x1xi32>
    %37 = vector.broadcast %36 : vector<32x1xi32> to vector<32x32xi32>
    %38 = arith.cmpi eq, %37, %1 : vector<32x32xi32>
    %39 = arith.extui %38 : vector<32x32xi1> to vector<32x32xi32>
    %40 = arith.sitofp %39 : vector<32x32xi32> to vector<32x32xf32>
    %41 = vector.extract_strided_slice %0 {offsets = [6, 0], sizes = [26, 1], strides = [1, 1]} : vector<32x1xi32> to vector<26x1xi32>
    %42 = vector.extract_strided_slice %0 {offsets = [0, 0], sizes = [6, 1], strides = [1, 1]} : vector<32x1xi32> to vector<6x1xi32>
    %43 = tpu.concatenate %41, %42 in 0 : vector<26x1xi32>, vector<6x1xi32> -> vector<32x1xi32>
    %44 = vector.broadcast %43 : vector<32x1xi32> to vector<32x32xi32>
    %45 = arith.cmpi eq, %44, %1 : vector<32x32xi32>
    %46 = arith.extui %45 : vector<32x32xi1> to vector<32x32xi32>
    %47 = arith.sitofp %46 : vector<32x32xi32> to vector<32x32xf32>
    %48 = vector.extract_strided_slice %0 {offsets = [7, 0], sizes = [25, 1], strides = [1, 1]} : vector<32x1xi32> to vector<25x1xi32>
    %49 = vector.extract_strided_slice %0 {offsets = [0, 0], sizes = [7, 1], strides = [1, 1]} : vector<32x1xi32> to vector<7x1xi32>
    %50 = tpu.concatenate %48, %49 in 0 : vector<25x1xi32>, vector<7x1xi32> -> vector<32x1xi32>
    %51 = vector.broadcast %50 : vector<32x1xi32> to vector<32x32xi32>
    %52 = arith.cmpi eq, %51, %1 : vector<32x32xi32>
    %53 = arith.extui %52 : vector<32x32xi1> to vector<32x32xi32>
    %54 = arith.sitofp %53 : vector<32x32xi32> to vector<32x32xf32>
    %55 = tpu.concatenate %5, %12, %19, %26, %33, %40, %47, %54 in 1 : vector<32x32xf32>, vector<32x32xf32>, vector<32x32xf32>, vector<32x32xf32>, vector<32x32xf32>, vector<32x32xf32>, vector<32x32xf32>, vector<32x32xf32> -> vector<32x256xf32>
    %c0_1 = arith.constant 0 : index
    %c0_2 = arith.constant 0 : index
    %56 = vector.load %arg1[%c0_1, %c0_2] : memref<256x128xf32, #tpu.memory_space<vmem>>, vector<256x128xf32>
    %cst = arith.constant dense<0.000000e+00> : vector<32x128xf32>
    %57 = tpu.matmul %55, %56, %cst {dimension_numbers = #tpu.dot_dimension_numbers<[1], [0], [0], [1], [0, 0, 1, 1], [], []>} : vector<32x256xf32>, vector<256x128xf32>, vector<32x128xf32> -> vector<32x128xf32>
    %c0_3 = arith.constant 0 : index
    %c0_4 = arith.constant 0 : index
    %58 = vector.load %arg2[%c0_3, %c0_4] : memref<40x128xf32, #tpu.memory_space<vmem>>, vector<32x128xf32>
    %c32 = arith.constant 32 : index
    %c0_5 = arith.constant 0 : index
    %59 = vector.load %arg2[%c32, %c0_5] : memref<40x128xf32, #tpu.memory_space<vmem>>, vector<8x128xf32>
    %60 = vector.extract_strided_slice %59 {offsets = [0, 0], sizes = [1, 128], strides = [1, 1]} : vector<8x128xf32> to vector<1x128xf32>
    %61 = vector.extract_strided_slice %59 {offsets = [1, 0], sizes = [1, 128], strides = [1, 1]} : vector<8x128xf32> to vector<1x128xf32>
    %62 = vector.extract_strided_slice %59 {offsets = [2, 0], sizes = [1, 1], strides = [1, 1]} : vector<8x128xf32> to vector<1x1xf32>
    %63 = vector.broadcast %60 : vector<1x128xf32> to vector<32x128xf32>
    %64 = arith.addf %57, %63 : vector<32x128xf32>
    %cst_6 = arith.constant 0.000000e+00 : f32
    %65 = vector.broadcast %cst_6 : f32 to vector<32x128xf32>
    %66 = arith.maximumf %64, %65 : vector<32x128xf32>
    %67 = arith.mulf %66, %58 : vector<32x128xf32>
    %68 = vector.shape_cast %67 : vector<32x128xf32> to vector<2x16x128xf32>
    %cst_7 = arith.constant dense<0xFF800000> : vector<2x128xf32>
    %69 = vector.multi_reduction <maximumf>, %68, %cst_7 [1] : vector<2x16x128xf32> to vector<2x128xf32>
    %70 = vector.broadcast %61 : vector<1x128xf32> to vector<2x128xf32>
    %71 = arith.mulf %69, %70 : vector<2x128xf32>
    %cst_8 = arith.constant dense<0.000000e+00> : vector<2xf32>
    %72 = vector.multi_reduction <add>, %71, %cst_8 [1] : vector<2x128xf32> to vector<2xf32>
    %73 = vector.shape_cast %72 : vector<2xf32> to vector<2x1xf32>
    %74 = vector.broadcast %62 : vector<1x1xf32> to vector<2x1xf32>
    %75 = arith.addf %73, %74 : vector<2x1xf32>
    %76 = arith.negf %75 : vector<2x1xf32>
    %77 = math.exp %76 : vector<2x1xf32>
    %cst_9 = arith.constant 1.000000e+00 : f32
    %78 = vector.broadcast %cst_9 : f32 to vector<2x1xf32>
    %79 = arith.addf %78, %77 : vector<2x1xf32>
    %80 = arith.divf %78, %79 : vector<2x1xf32>
    %81 = vector.shape_cast %80 : vector<2x1xf32> to vector<2x1xf32>
    %82 = vector.broadcast %81 : vector<2x1xf32> to vector<2x128xf32>
    %c0_10 = arith.constant 0 : index
    %c0_11 = arith.constant 0 : index
    %83 = vector.load %arg3[%c0_10, %c0_11] : memref<2x128xf32, #tpu.memory_space<vmem>>, vector<2x128xf32>
    tpu.vector_store %arg3[%c0_10, %c0_11], %82 {strides = array<i32>} : memref<2x128xf32, #tpu.memory_space<vmem>>, vector<2x128xf32>,
    return
  }
}

</mosaic_0001>

<llo_original>
// kernel: tpu_custom_call.1
$region0: #{tpu_custom_call.1}
  #allocation0 [shape = 'u32[]', space=smem, size = 0x4, offset = 0x4, fixed_abs, tag = 'smem constant byte address 0x4 - core index']
  #allocation1 [shape = 'u32[144,128]{1,0:T(1,128)}', space=vmem, size = 0x12000, scoped, tag = 'internal scratch']
  %s0 = inlined_call_operand.vmem [shape: s32[32,1], index: 0, kind: input, shape index: {}]
  %s1 = inlined_call_operand.hbm [shape: f32[256,128], index: 1, kind: input, shape index: {}]
  %s2 = inlined_call_operand.vmem [shape: f32[40,128], index: 2, kind: input, shape index: {}]
  %s3 = inlined_call_operand.hbm [shape: f32[2,128], index: 3, kind: output, shape index: {}]
  %s4 = sld [smem:[#allocation0]]
  $region26: #{tpu_custom_call.1} parent=0
    _
  %s6 = ssub.s32 1, %s4
  %s7 = scalar_select 0, %s6, %s4
  $region1: #{tpu_custom_call.1} parent=0
    #allocation2 [shape = 'u8[131072]{0}', space=vmem, size = 0x20000, scoped, tag = 'input window, operand 1, single buffered']
    #allocation3 [shape = 's32[1]{0}', space=sflag, size = 0x4, scoped, tag = 'scoped memory for tpu_custom_call.1']
    #allocation4 [shape = 's32[1]{0}', space=sflag, size = 0x4, scoped, tag = 'scoped memory for tpu_custom_call.1']
    #allocation5 [shape = 'u8[1024]{0}', space=vmem, size = 0x400, scoped, tag = 'output window, operand 0, single buffered']
    %8 = vsyncpa [#allocation3], 0
    %9 = vsyncpa [#allocation4], 0
    // Predicated region
    $region2: #{tpu_custom_call.1} parent=1 // pred_check
      _
    $region3: #{tpu_custom_call.1} parent=1 // pred_check_branch
      %11 = sbr.rel (0) target = $region5
    $region4: #{tpu_custom_call.1} parent=1 // pred_region
      _
    $region5: #{tpu_custom_call.1} parent=1 // pred_fallthru
      _
    // Predicated region
    $region6: #{tpu_custom_call.1} parent=1 // pred_check
      _
    $region7: #{tpu_custom_call.1} parent=1 // pred_check_branch
      %13 = sbr.rel (0) target = $region9
    $region8: #{tpu_custom_call.1} parent=1 // pred_region
      %s15 = ssub.s32 4096, 4096
      %16 = vsyncadd [#allocation3], %s15
      %s17 = sshll.u32 [#allocation2], 4
      %s18 = int_to_ptr.vmem [resolvable:$true] %s17
      %23 = dma.hbm_to_vmem [thread:$0]  %s1, 4096, %s18, [#allocation3], 128, 128, 8
    $region9: #{tpu_custom_call.1} parent=1 // pred_fallthru
      _
    // Predicated region
    $region10: #{tpu_custom_call.1} parent=1 // pred_check
      _
    $region11: #{tpu_custom_call.1} parent=1 // pred_check_branch
      %25 = sbr.rel (0) target = $region13
    $region12: #{tpu_custom_call.1} parent=1 // pred_region
      _
    $region13: #{tpu_custom_call.1} parent=1 // pred_fallthru
      _
    // Predicated region
    $region14: #{tpu_custom_call.1} parent=1 // pred_check
      _
    $region15: #{tpu_custom_call.1} parent=1 // pred_check_branch
      %27 = sbr.rel (0) target = $region17
    $region16: #{tpu_custom_call.1} parent=1 // pred_region
      %28 = dma.done [#allocation3], 4096
    $region17: #{tpu_custom_call.1} parent=1 // pred_fallthru
      _
    %v29 = vld [vmem:[%s0] sm:$0xff]
    %v30 = vld [vmem:[%s0 + $0x8] sm:$0xff]
    %v31 = vld [vmem:[%s0 + $0x10] sm:$0xff]
    %v32 = vld [vmem:[%s0 + $0x18] sm:$0xff]
    %v33 = vlaneseq
    %v34 = vand.u32 %v33, 127
    %35 = vset.pattern.permute.xlu0 0
    %36 = vperm.xlu0 %35, %v29
    %v37 = vpop.permute.xlu0 %36
    %38 = vset.pattern.permute.xlu0 0
    %39 = vperm.xlu0 %38, %v30
    %v40 = vpop.permute.xlu0 %39
    %41 = vset.pattern.permute.xlu0 0
    %42 = vperm.xlu0 %41, %v31
    %v43 = vpop.permute.xlu0 %42
    %44 = vset.pattern.permute.xlu0 0
    %45 = vperm.xlu0 %44, %v32
    %v46 = vpop.permute.xlu0 %45
    %vm47 = vcmp.eq.s32.totalorder %v37, %v34
    %vm48 = vcmp.eq.s32.totalorder %v40, %v34
    %vm49 = vcmp.eq.s32.totalorder %v43, %v34
    %vm50 = vcmp.eq.s32.totalorder %v46, %v34
    %v51 = vsel %vm47, 1, 0
    %v52 = vsel %vm48, 1, 0
    %v53 = vsel %vm49, 1, 0
    %v54 = vsel %vm50, 1, 0
    %v55 = vcvt.s32.f32 %v51
    %v56 = vcvt.s32.f32 %v52
    %v57 = vcvt.s32.f32 %v53
    %v58 = vcvt.s32.f32 %v54
    %vm59 = vcmask 1046528
    %v60 = vrot.slane %v29, 1
    %v61 = vrot.slane %v30, 1
    %v62 = vsel %vm59, %v60, %v61
    %v63 = vrot.slane %v31, 1
    %v64 = vsel %vm59, %v61, %v63
    %v65 = vrot.slane %v32, 1
    %v66 = vsel %vm59, %v63, %v65
    %v67 = vsel %vm59, %v65, %v60
    %68 = vset.pattern.permute.xlu0 0
    %69 = vperm.xlu0 %68, %v62
    %v70 = vpop.permute.xlu0 %69
    %71 = vset.pattern.permute.xlu0 0
    %72 = vperm.xlu0 %71, %v64
    %v73 = vpop.permute.xlu0 %72
    %74 = vset.pattern.permute.xlu0 0
    %75 = vperm.xlu0 %74, %v66
    %v76 = vpop.permute.xlu0 %75
    %77 = vset.pattern.permute.xlu0 0
    %78 = vperm.xlu0 %77, %v67
    %v79 = vpop.permute.xlu0 %78
    %vm80 = vcmp.eq.s32.totalorder %v70, %v34
    %vm81 = vcmp.eq.s32.totalorder %v73, %v34
    %vm82 = vcmp.eq.s32.totalorder %v76, %v34
    %vm83 = vcmp.eq.s32.totalorder %v79, %v34
    %v84 = vsel %vm80, 1, 0
    %v85 = vsel %vm81, 1, 0
    %v86 = vsel %vm82, 1, 0
    %v87 = vsel %vm83, 1, 0
    %v88 = vcvt.s32.f32 %v84
    %v89 = vcvt.s32.f32 %v85
    %v90 = vcvt.s32.f32 %v86
    %v91 = vcvt.s32.f32 %v87
    %vm92 = vcmask 1045504
    %v93 = vrot.slane %v29, 2
    %v94 = vrot.slane %v30, 2
    %v95 = vsel %vm92, %v93, %v94
    %v96 = vrot.slane %v31, 2
    %v97 = vsel %vm92, %v94, %v96
    %v98 = vrot.slane %v32, 2
    %v99 = vsel %vm92, %v96, %v98
    %v100 = vsel %vm92, %v98, %v93
    %101 = vset.pattern.permute.xlu0 0
    %102 = vperm.xlu0 %101, %v95
    %v103 = vpop.permute.xlu0 %102
    %104 = vset.pattern.permute.xlu0 0
    %105 = vperm.xlu0 %104, %v97
    %v106 = vpop.permute.xlu0 %105
    %107 = vset.pattern.permute.xlu0 0
    %108 = vperm.xlu0 %107, %v99
    %v109 = vpop.permute.xlu0 %108
    %110 = vset.pattern.permute.xlu0 0
    %111 = vperm.xlu0 %110, %v100
    %v112 = vpop.permute.xlu0 %111
    %vm113 = vcmp.eq.s32.totalorder %v103, %v34
    %vm114 = vcmp.eq.s32.totalorder %v106, %v34
    %vm115 = vcmp.eq.s32.totalorder %v109, %v34
    %vm116 = vcmp.eq.s32.totalorder %v112, %v34
    %v117 = vsel %vm113, 1, 0
    %v118 = vsel %vm114, 1, 0
    %v119 = vsel %vm115, 1, 0
    %v120 = vsel %vm116, 1, 0
    %v121 = vcvt.s32.f32 %v117
    %v122 = vcvt.s32.f32 %v118
    %v123 = vcvt.s32.f32 %v119
    %v124 = vcvt.s32.f32 %v120
    %vm125 = vcmask 1044480
    %v126 = vrot.slane %v29, 3
    %v127 = vrot.slane %v30, 3
    %v128 = vsel %vm125, %v126, %v127
    %v129 = vrot.slane %v31, 3
    %v130 = vsel %vm125, %v127, %v129
    %v131 = vrot.slane %v32, 3
    %v132 = vsel %vm125, %v129, %v131
    %v133 = vsel %vm125, %v131, %v126
    %134 = vset.pattern.permute.xlu0 0
    %135 = vperm.xlu0 %134, %v128
    %v136 = vpop.permute.xlu0 %135
    %137 = vset.pattern.permute.xlu0 0
    %138 = vperm.xlu0 %137, %v130
    %v139 = vpop.permute.xlu0 %138
    %140 = vset.pattern.permute.xlu0 0
    %141 = vperm.xlu0 %140, %v132
    %v142 = vpop.permute.xlu0 %141
    %143 = vset.pattern.permute.xlu0 0
    %144 = vperm.xlu0 %143, %v133
    %v145 = vpop.permute.xlu0 %144
    %vm146 = vcmp.eq.s32.totalorder %v136, %v34
    %vm147 = vcmp.eq.s32.totalorder %v139, %v34
    %vm148 = vcmp.eq.s32.totalorder %v142, %v34
    %vm149 = vcmp.eq.s32.totalorder %v145, %v34
    %v150 = vsel %vm146, 1, 0
    %v151 = vsel %vm147, 1, 0
    %v152 = vsel %vm148, 1, 0
    %v153 = vsel %vm149, 1, 0
    %v154 = vcvt.s32.f32 %v150
    %v155 = vcvt.s32.f32 %v151
    %v156 = vcvt.s32.f32 %v152
    %v157 = vcvt.s32.f32 %v153
    %vm158 = vcmask 1043456
    %v159 = vrot.slane %v29, 4
    %v160 = vrot.slane %v30, 4
    %v161 = vsel %vm158, %v159, %v160
    %v162 = vrot.slane %v31, 4
    %v163 = vsel %vm158, %v160, %v162
    %v164 = vrot.slane %v32, 4
    %v165 = vsel %vm158, %v162, %v164
    %v166 = vsel %vm158, %v164, %v159
    %167 = vset.pattern.permute.xlu0 0
    %168 = vperm.xlu0 %167, %v161
    %v169 = vpop.permute.xlu0 %168
    %170 = vset.pattern.permute.xlu0 0
    %171 = vperm.xlu0 %170, %v163
    %v172 = vpop.permute.xlu0 %171
    %173 = vset.pattern.permute.xlu0 0
    %174 = vperm.xlu0 %173, %v165
    %v175 = vpop.permute.xlu0 %174
    %176 = vset.pattern.permute.xlu0 0
    %177 = vperm.xlu0 %176, %v166
    %v178 = vpop.permute.xlu0 %177
    %vm179 = vcmp.eq.s32.totalorder %v169, %v34
    %vm180 = vcmp.eq.s32.totalorder %v172, %v34
    %vm181 = vcmp.eq.s32.totalorder %v175, %v34
    %vm182 = vcmp.eq.s32.totalorder %v178, %v34
    %v183 = vsel %vm179, 1, 0
    %v184 = vsel %vm180, 1, 0
    %v185 = vsel %vm181, 1, 0
    %v186 = vsel %vm182, 1, 0
    %v187 = vcvt.s32.f32 %v183
    %v188 = vcvt.s32.f32 %v184
    %v189 = vcvt.s32.f32 %v185
    %v190 = vcvt.s32.f32 %v186
    %vm191 = vcmask 1042432
    %v192 = vrot.slane %v29, 5
    %v193 = vrot.slane %v30, 5
    %v194 = vsel %vm191, %v192, %v193
    %v195 = vrot.slane %v31, 5
    %v196 = vsel %vm191, %v193, %v195
    %v197 = vrot.slane %v32, 5
    %v198 = vsel %vm191, %v195, %v197
    %v199 = vsel %vm191, %v197, %v192
    %200 = vset.pattern.permute.xlu0 0
    %201 = vperm.xlu0 %200, %v194
    %v202 = vpop.permute.xlu0 %201
    %203 = vset.pattern.permute.xlu0 0
    %204 = vperm.xlu0 %203, %v196
    %v205 = vpop.permute.xlu0 %204
    %206 = vset.pattern.permute.xlu0 0
    %207 = vperm.xlu0 %206, %v198
    %v208 = vpop.permute.xlu0 %207
    %209 = vset.pattern.permute.xlu0 0
    %210 = vperm.xlu0 %209, %v199
    %v211 = vpop.permute.xlu0 %210
    %vm212 = vcmp.eq.s32.totalorder %v202, %v34
    %vm213 = vcmp.eq.s32.totalorder %v205, %v34
    %vm214 = vcmp.eq.s32.totalorder %v208, %v34
    %vm215 = vcmp.eq.s32.totalorder %v211, %v34
    %v216 = vsel %vm212, 1, 0
    %v217 = vsel %vm213, 1, 0
    %v218 = vsel %vm214, 1, 0
    %v219 = vsel %vm215, 1, 0
    %v220 = vcvt.s32.f32 %v216
    %v221 = vcvt.s32.f32 %v217
    %v222 = vcvt.s32.f32 %v218
    %v223 = vcvt.s32.f32 %v219
    %vm224 = vcmask 1041408
    %v225 = vrot.slane %v29, 6
    %v226 = vrot.slane %v30, 6
    %v227 = vsel %vm224, %v225, %v226
    %v228 = vrot.slane %v31, 6
    %v229 = vsel %vm224, %v226, %v228
    %v230 = vrot.slane %v32, 6
    %v231 = vsel %vm224, %v228, %v230
    %v232 = vsel %vm224, %v230, %v225
    %233 = vset.pattern.permute.xlu0 0
    %234 = vperm.xlu0 %233, %v227
    %v235 = vpop.permute.xlu0 %234
    %236 = vset.pattern.permute.xlu0 0
    %237 = vperm.xlu0 %236, %v229
    %v238 = vpop.permute.xlu0 %237
    %239 = vset.pattern.permute.xlu0 0
    %240 = vperm.xlu0 %239, %v231
    %v241 = vpop.permute.xlu0 %240
    %242 = vset.pattern.permute.xlu0 0
    %243 = vperm.xlu0 %242, %v232
    %v244 = vpop.permute.xlu0 %243
    %vm245 = vcmp.eq.s32.totalorder %v235, %v34
    %vm246 = vcmp.eq.s32.totalorder %v238, %v34
    %vm247 = vcmp.eq.s32.totalorder %v241, %v34
    %vm248 = vcmp.eq.s32.totalorder %v244, %v34
    %v249 = vsel %vm245, 1, 0
    %v250 = vsel %vm246, 1, 0
    %v251 = vsel %vm247, 1, 0
    %v252 = vsel %vm248, 1, 0
    %v253 = vcvt.s32.f32 %v249
    %v254 = vcvt.s32.f32 %v250
    %v255 = vcvt.s32.f32 %v251
    %v256 = vcvt.s32.f32 %v252
    %vm257 = vcmask 1040384
    %v258 = vrot.slane %v29, 7
    %v259 = vrot.slane %v30, 7
    %v260 = vsel %vm257, %v258, %v259
    %v261 = vrot.slane %v31, 7
    %v262 = vsel %vm257, %v259, %v261
    %v263 = vrot.slane %v32, 7
    %v264 = vsel %vm257, %v261, %v263
    %v265 = vsel %vm257, %v263, %v258
    %266 = vset.pattern.permute.xlu0 0
    %267 = vperm.xlu0 %266, %v260
    %v268 = vpop.permute.xlu0 %267
    %269 = vset.pattern.permute.xlu0 0
    %270 = vperm.xlu0 %269, %v262
    %v271 = vpop.permute.xlu0 %270
    %272 = vset.pattern.permute.xlu0 0
    %273 = vperm.xlu0 %272, %v264
    %v274 = vpop.permute.xlu0 %273
    %275 = vset.pattern.permute.xlu0 0
    %276 = vperm.xlu0 %275, %v265
    %v277 = vpop.permute.xlu0 %276
    %vm278 = vcmp.eq.s32.totalorder %v268, %v34
    %vm279 = vcmp.eq.s32.totalorder %v271, %v34
    %vm280 = vcmp.eq.s32.totalorder %v274, %v34
    %vm281 = vcmp.eq.s32.totalorder %v277, %v34
    %v282 = vsel %vm278, 1, 0
    %v283 = vsel %vm279, 1, 0
    %v284 = vsel %vm280, 1, 0
    %v285 = vsel %vm281, 1, 0
    %v286 = vcvt.s32.f32 %v282
    %v287 = vcvt.s32.f32 %v283
    %v288 = vcvt.s32.f32 %v284
    %v289 = vcvt.s32.f32 %v285
    %294 = vrot.lane.b32.xlu0 %v88, 32
    %v295 = vpop.permute.xlu0 %294
    %296 = vrot.lane.b32.xlu0 %v89, 32
    %v297 = vpop.permute.xlu0 %296
    %298 = vrot.lane.b32.xlu0 %v90, 32
    %v299 = vpop.permute.xlu0 %298
    %300 = vrot.lane.b32.xlu0 %v91, 32
    %v301 = vpop.permute.xlu0 %300
    %310 = vrot.lane.b32.xlu0 %v121, 64
    %v311 = vpop.permute.xlu0 %310
    %312 = vrot.lane.b32.xlu0 %v122, 64
    %v313 = vpop.permute.xlu0 %312
    %314 = vrot.lane.b32.xlu0 %v123, 64
    %v315 = vpop.permute.xlu0 %314
    %316 = vrot.lane.b32.xlu0 %v124, 64
    %v317 = vpop.permute.xlu0 %316
    %326 = vrot.lane.b32.xlu0 %v154, 96
    %v327 = vpop.permute.xlu0 %326
    %328 = vrot.lane.b32.xlu0 %v155, 96
    %v329 = vpop.permute.xlu0 %328
    %330 = vrot.lane.b32.xlu0 %v156, 96
    %v331 = vpop.permute.xlu0 %330
    %332 = vrot.lane.b32.xlu0 %v157, 96
    %v333 = vpop.permute.xlu0 %332
    %342 = vrot.lane.b32.xlu0 %v220, 32
    %v343 = vpop.permute.xlu0 %342
    %344 = vrot.lane.b32.xlu0 %v221, 32
    %v345 = vpop.permute.xlu0 %344
    %346 = vrot.lane.b32.xlu0 %v222, 32
    %v347 = vpop.permute.xlu0 %346
    %348 = vrot.lane.b32.xlu0 %v223, 32
    %v349 = vpop.permute.xlu0 %348
    %358 = vrot.lane.b32.xlu0 %v253, 64
    %v359 = vpop.permute.xlu0 %358
    %360 = vrot.lane.b32.xlu0 %v254, 64
    %v361 = vpop.permute.xlu0 %360
    %362 = vrot.lane.b32.xlu0 %v255, 64
    %v363 = vpop.permute.xlu0 %362
    %364 = vrot.lane.b32.xlu0 %v256, 64
    %v365 = vpop.permute.xlu0 %364
    %374 = vrot.lane.b32.xlu0 %v286, 96
    %v375 = vpop.permute.xlu0 %374
    %376 = vrot.lane.b32.xlu0 %v287, 96
    %v377 = vpop.permute.xlu0 %376
    %378 = vrot.lane.b32.xlu0 %v288, 96
    %v379 = vpop.permute.xlu0 %378
    %380 = vrot.lane.b32.xlu0 %v289, 96
    %v381 = vpop.permute.xlu0 %380
    %vm386 = vcmask 261120
    %v387 = vsel %vm386, %v55, %v295
    %v388 = vsel %vm386, %v56, %v297
    %v389 = vsel %vm386, %v57, %v299
    %v390 = vsel %vm386, %v58, %v301
    %vm391 = vcmask 523264
    %v392 = vsel %vm391, %v387, %v311
    %v393 = vsel %vm391, %v388, %v313
    %v394 = vsel %vm391, %v389, %v315
    %v395 = vsel %vm391, %v390, %v317
    %vm396 = vcmask 785408
    %v397 = vsel %vm396, %v392, %v327
    %v398 = vsel %vm396, %v393, %v329
    %v399 = vsel %vm396, %v394, %v331
    %v400 = vsel %vm396, %v395, %v333
    %v401 = vsel %vm386, %v187, %v343
    %v402 = vsel %vm386, %v188, %v345
    %v403 = vsel %vm386, %v189, %v347
    %v404 = vsel %vm386, %v190, %v349
    %v405 = vsel %vm391, %v401, %v359
    %v406 = vsel %vm391, %v402, %v361
    %v407 = vsel %vm391, %v403, %v363
    %v408 = vsel %vm391, %v404, %v365
    %v409 = vsel %vm396, %v405, %v375
    %v410 = vsel %vm396, %v406, %v377
    %v411 = vsel %vm396, %v407, %v379
    %v412 = vsel %vm396, %v408, %v381
    %v413 = vld [vmem:[#allocation2] sm:$0xff]
    %v414 = vld [vmem:[#allocation2 + $0x8] sm:$0xff]
    %v415 = vld [vmem:[#allocation2 + $0x10] sm:$0xff]
    %v416 = vld [vmem:[#allocation2 + $0x18] sm:$0xff]
    %v417 = vld [vmem:[#allocation2 + $0x20] sm:$0xff]
    %v418 = vld [vmem:[#allocation2 + $0x28] sm:$0xff]
    %v419 = vld [vmem:[#allocation2 + $0x30] sm:$0xff]
    %v420 = vld [vmem:[#allocation2 + $0x38] sm:$0xff]
    %v421 = vld [vmem:[#allocation2 + $0x40] sm:$0xff]
    %v422 = vld [vmem:[#allocation2 + $0x48] sm:$0xff]
    %v423 = vld [vmem:[#allocation2 + $0x50] sm:$0xff]
    %v424 = vld [vmem:[#allocation2 + $0x58] sm:$0xff]
    %v425 = vld [vmem:[#allocation2 + $0x60] sm:$0xff]
    %v426 = vld [vmem:[#allocation2 + $0x68] sm:$0xff]
    %v427 = vld [vmem:[#allocation2 + $0x70] sm:$0xff]
    %v428 = vld [vmem:[#allocation2 + $0x78] sm:$0xff]
    %v429 = vld [vmem:[#allocation2 + $0x80] sm:$0xff]
    %v430 = vld [vmem:[#allocation2 + $0x88] sm:$0xff]
    %v431 = vld [vmem:[#allocation2 + $0x90] sm:$0xff]
    %v432 = vld [vmem:[#allocation2 + $0x98] sm:$0xff]
    %v433 = vld [vmem:[#allocation2 + $0xa0] sm:$0xff]
    %v434 = vld [vmem:[#allocation2 + $0xa8] sm:$0xff]
    %v435 = vld [vmem:[#allocation2 + $0xb0] sm:$0xff]
    %v436 = vld [vmem:[#allocation2 + $0xb8] sm:$0xff]
    %v437 = vld [vmem:[#allocation2 + $0xc0] sm:$0xff]
    %v438 = vld [vmem:[#allocation2 + $0xc8] sm:$0xff]
    %v439 = vld [vmem:[#allocation2 + $0xd0] sm:$0xff]
    %v440 = vld [vmem:[#allocation2 + $0xd8] sm:$0xff]
    %v441 = vld [vmem:[#allocation2 + $0xe0] sm:$0xff]
    %v442 = vld [vmem:[#allocation2 + $0xe8] sm:$0xff]
    %v443 = vld [vmem:[#allocation2 + $0xf0] sm:$0xff]
    %v444 = vld [vmem:[#allocation2 + $0xf8] sm:$0xff]
    %v445 = vld [vmem:[%s2] sm:$0xff]
    %v446 = vld [vmem:[%s2 + $0x8] sm:$0xff]
    %v447 = vld [vmem:[%s2 + $0x10] sm:$0xff]
    %v448 = vld [vmem:[%s2 + $0x18] sm:$0xff]
    %v449 = vld [vmem:[%s2 + $0x20] sm:$0xff]
    %v450 = vlaneseq
    %v451 = vshrl.u32 %v450, 7
    %v452 = vsub.s32 0, %v451
    %v453 = vrot.slane %v449, %v452
    %454 = vmatprep.subr.mxu0 0.0
    %455 = vmatpush1.msra.mxu0 %v413
    %456 = vmatprep.subr.mxu0 0.0
    %457 = vmatpush1.msra.mxu0 %v414
    %458 = vmatprep.subr.mxu0 0.0
    %459 = vmatpush1.msra.mxu0 %v415
    %460 = vmatprep.subr.mxu0 0.0
    %461 = vmatpush1.msra.mxu0 %v416
    %462 = vmatprep.subr.mxu0 0.0
    %463 = vmatpush1.msra.mxu0 %v417
    %464 = vmatprep.subr.mxu0 0.0
    %465 = vmatpush1.msra.mxu0 %v418
    %466 = vmatprep.subr.mxu0 0.0
    %467 = vmatpush1.msra.mxu0 %v419
    %468 = vmatprep.subr.mxu0 0.0
    %469 = vmatpush1.msra.mxu0 %v420
    %470 = vmatprep.subr.mxu0 0.0
    %471 = vmatpush1.msra.mxu0 %v421
    %472 = vmatprep.subr.mxu0 0.0
    %473 = vmatpush1.msra.mxu0 %v422
    %474 = vmatprep.subr.mxu0 0.0
    %475 = vmatpush1.msra.mxu0 %v423
    %476 = vmatprep.subr.mxu0 0.0
    %477 = vmatpush1.msra.mxu0 %v424
    %478 = vmatprep.subr.mxu0 0.0
    %479 = vmatpush1.msra.mxu0 %v425
    %480 = vmatprep.subr.mxu0 0.0
    %481 = vmatpush1.msra.mxu0 %v426
    %482 = vmatprep.subr.mxu0 0.0
    %483 = vmatpush1.msra.mxu0 %v427
    %484 = vmatprep.subr.mxu0 0.0
    %485 = vmatpush1.msra.mxu0 %v428
    %486 = vmatprep.subr.mxu0 0.0
    %487 = vmatpush1.msra.mxu0 %v429
    %488 = vmatprep.subr.mxu0 0.0
    %489 = vmatpush1.msra.mxu0 %v430
    %490 = vmatprep.subr.mxu0 0.0
    %491 = vmatpush1.msra.mxu0 %v431
    %492 = vmatprep.subr.mxu0 0.0
    %493 = vmatpush1.msra.mxu0 %v432
    %494 = vmatprep.subr.mxu0 0.0
    %495 = vmatpush1.msra.mxu0 %v433
    %496 = vmatprep.subr.mxu0 0.0
    %497 = vmatpush1.msra.mxu0 %v434
    %498 = vmatprep.subr.mxu0 0.0
    %499 = vmatpush1.msra.mxu0 %v435
    %500 = vmatprep.subr.mxu0 0.0
    %501 = vmatpush1.msra.mxu0 %v436
    %502 = vmatprep.subr.mxu0 0.0
    %503 = vmatpush1.msra.mxu0 %v437
    %504 = vmatprep.subr.mxu0 0.0
    %505 = vmatpush1.msra.mxu0 %v438
    %506 = vmatprep.subr.mxu0 0.0
    %507 = vmatpush1.msra.mxu0 %v439
    %508 = vmatprep.subr.mxu0 0.0
    %509 = vmatpush1.msra.mxu0 %v440
    %510 = vmatprep.subr.mxu0 0.0
    %511 = vmatpush1.msra.mxu0 %v441
    %512 = vmatprep.subr.mxu0 0.0
    %513 = vmatpush1.msra.mxu0 %v442
    %514 = vmatprep.subr.mxu0 0.0
    %515 = vmatpush1.msra.mxu0 %v443
    %516 = vmatprep.subr.mxu0 0.0
    %517 = vmatpush1.msra.mxu0 %v444
    %518 = vmatprep.mubr.f32.mxu0 %v409
    %519 = vmatmul.mubr.f32.gmra.mrb[0].mxu0 %v397
    %v520 = vpop.f32.mrb[0].mxu0
    %v521 = vadd.f32 %v453, %v520
    %v522 = vpop.f32.mrb[0].mxu0
    %523 = vmatprep.mubr.f32.mxu0 %v410
    %524 = vmatmul.mubr.f32.gmra.mrb[0].mxu0 %v398
    %v525 = vpop.f32.mrb[0].mxu0
    %v526 = vadd.f32 %v453, %v525
    %v527 = vpop.f32.mrb[0].mxu0
    %528 = vmatprep.mubr.f32.mxu0 %v411
    %529 = vmatmul.mubr.f32.gmra.mrb[0].mxu0 %v399
    %v530 = vpop.f32.mrb[0].mxu0
    %v531 = vadd.f32 %v453, %v530
    %v532 = vpop.f32.mrb[0].mxu0
    %533 = vmatprep.mubr.f32.mxu0 %v412
    %534 = vmatmul.mubr.f32.gmra.mrb[0].mxu0 %v400
    %v535 = vpop.f32.mrb[0].mxu0
    %v536 = vadd.f32 %v453, %v535
    %v537 = vpop.f32.mrb[0].mxu0
    %538 = vdwg.mxu0
    %v539 = vmax.f32 %v521, 0.0
    %v540 = vmax.f32 %v526, 0.0
    %v541 = vmax.f32 %v531, 0.0
    %v542 = vmax.f32 %v536, 0.0
    %v543 = vmul.f32 %v539, %v445
    %v544 = vmul.f32 %v540, %v446
    %v545 = vmul.f32 %v541, %v447
    %v546 = vmul.f32 %v542, %v448
    %v547 = vmax.f32 %v543, %v544
    %v548 = vrot.slane %v547, 4
    %v549 = vmax.f32 %v547, %v548
    %v550 = vrot.slane %v549, 2
    %v551 = vmax.f32 %v549, %v550
    %v552 = vrot.slane %v551, 1
    %v553 = vmax.f32 %v551, %v552
    %v554 = vmax.f32 %v545, %v546
    %v555 = vrot.slane %v554, 4
    %v556 = vmax.f32 %v554, %v555
    %v557 = vrot.slane %v556, 2
    %v558 = vmax.f32 %v556, %v557
    %v559 = vrot.slane %v558, 1
    %v560 = vmax.f32 %v558, %v559
    %v561 = vlaneseq
    %v562 = vshrl.u32 %v561, 7
    %v563 = vsub.s32 1, %v562
    %v564 = vrot.slane %v449, %v563
    %v565 = vmul.f32 %v553, %v564
    %v566 = vmul.f32 %v560, %v564
    %v569 = vrot.slane %v566, 7
    %vm570 = vcmask 1041409
    %v571 = vsel %vm570, %v569, %v565
    %v573 = vsel %vm224, %v571, 0.0
    %574 = vadd.xlane.f32.xlu0 %v573
    %v575 = vpop.xlane.xlu0 %574
    %v576 = vlaneseq
    %v577 = vshrl.u32 %v576, 7
    %v578 = vsub.s32 2, %v577
    %v579 = vrot.slane %v449, %v578
    %v580 = vadd.f32 %v575, %v579
    %v581 = vxor.u32 %v580, 2147483648
    %v582 = vmul.f32 %v581, 1.442695
    %v583 = vpow.pop %v582
    %v584 = vadd.f32 %v583, 1.0
    %v585 = vrcp.pop %v584
    %v586 = vmul.f32 1.0, %v585
    %588 = vset.pattern.permute.xlu0 0
    %589 = vperm.xlu0 %588, %v586
    %v590 = vpop.permute.xlu0 %589
    %592 = vst [vmem:[#allocation5] sm:$0x3] %v590
    // Predicated region
    $region18: #{tpu_custom_call.1} parent=1 // pred_check
      _
    $region19: #{tpu_custom_call.1} parent=1 // pred_check_branch
      %594 = sbr.rel (0) target = $region21
    $region20: #{tpu_custom_call.1} parent=1 // pred_region
      %s596 = ssub.s32 32, 32
      %597 = vsyncadd [#allocation4], %s596
      %s599 = sshll.u32 [#allocation5], 4
      %s600 = int_to_ptr.vmem [resolvable:$true] %s599
      %602 = dma.vmem_to_hbm [thread:$0]  %s600, 32, %s3, [#allocation4]
    $region21: #{tpu_custom_call.1} parent=1 // pred_fallthru
      _
    // Predicated region
    $region22: #{tpu_custom_call.1} parent=1 // pred_check
      _
    $region23: #{tpu_custom_call.1} parent=1 // pred_check_branch
      %604 = sbr.rel (0) target = $region25
    $region24: #{tpu_custom_call.1} parent=1 // pred_region
      %605 = dma.done [#allocation4], 32
    $region25: #{tpu_custom_call.1} parent=1 // pred_fallthru
      _
    %606 = vsyncpa [#allocation3], 1
    %607 = vsyncpa [#allocation4], 1

</llo_original>
